<compile_context>
chip_gen: v7x
topology: tpu7x:2x2x1
jax: 0.10.0
libtpu: 0.0.40
codegen_flags: <defaults>
</compile_context>

<pallas_src>
import functools

import jax
import jax.numpy as jnp
from jax import lax
from jax.experimental import pallas as pl
from jax.experimental.pallas import tpu as pltpu


NUM_SPLITS = 2            # leading "parallel" grid axis (uses both TCs on v7x)
NEG = -1.0e9              # padding value for masked-out logit columns
_RESIDENT_SINGLE_BUFFER_BYTES = 2 * 1024 * 1024


# ---------------------------------------------------------------------------
# small in-kernel helpers (exact divides; padded columns handled by callers)
# ---------------------------------------------------------------------------
def _softmax(x):
    m = jnp.max(x, axis=1, keepdims=True)
    e = jnp.exp(x - m)
    return e / jnp.sum(e, axis=1, keepdims=True)


def _log_softmax(x):
    m = jnp.max(x, axis=1, keepdims=True)
    z = x - m
    s = jnp.sum(jnp.exp(z), axis=1, keepdims=True)
    return z - jnp.log(s)


# ---------------------------------------------------------------------------
# fused kernel: teacher matmul + base cross-entropy + distillation partial sums
# grid = (NUM_SPLITS, steps); per-split raw sums written to the split's output.
# ---------------------------------------------------------------------------
def _distill_kernel(x_ref, w_ref, b_ref, out_ref, kd_ref, lbl_ref,
                    o_ref, acc_ref, *, dist_type, tau, n_classes, c_pad):
    step = pl.program_id(1)

    @pl.when(step == 0)
    def _():
        acc_ref[0] = jnp.float32(0.0)
        acc_ref[1] = jnp.float32(0.0)

    out = out_ref[...].astype(jnp.float32)              # (tb, Cp) student logits
    kd = kd_ref[...].astype(jnp.float32)                # (tb, Cp) dist-token logits
    lbl = lbl_ref[...]                                   # (tb, 1) int32, -1 = padded row
    row_valid = (lbl >= 0).astype(jnp.float32)           # (tb, 1)
    iota_c = lax.broadcasted_iota(jnp.int32, out.shape, 1)
    has_col_pad = (c_pad != n_classes)
    col_valid = (iota_c < n_classes) if has_col_pad else None

    # ---- base cross-entropy without materializing log_softmax:
    #      -log p[label] = log(sum exp z) - z[label]
    m_o = jnp.max(out, axis=1, keepdims=True)
    z_o = out - m_o
    s_o = jnp.sum(jnp.exp(z_o), axis=1, keepdims=True)
    z_lbl = jnp.sum(jnp.where(iota_c == lbl, z_o, 0.0), axis=1, keepdims=True)
    base_partial = jnp.sum(row_valid * (jnp.log(s_o) - z_lbl))

    # ---- teacher forward fused in-kernel (bf16 operands, f32 MXU accumulate);
    #      padded classes get bias = NEG so their probability is exactly 0.
    te = jnp.dot(x_ref[...], w_ref[...],
                 preferred_element_type=jnp.float32) + b_ref[...]

    if dist_type == "soft":
        # F.kl_div(log_softmax(kd/T), log_softmax(te/T), 'sum', log_target=True)
        #   = sum p_t * (log p_t - log p_s)
        #   = sum p_t * (z_t - z_s) + (sum p_t) * (log s_s - log s_t)
        inv_t = jnp.float32(1.0 / tau)
        ks = kd * inv_t
        m_s = jnp.max(ks, axis=1, keepdims=True)
        z_s = ks - m_s
        s_s = jnp.sum(jnp.exp(z_s), axis=1, keepdims=True)
        ts = te * inv_t
        m_t = jnp.max(ts, axis=1, keepdims=True)
        z_t = ts - m_t
        e_t = jnp.exp(z_t)
        s_t = jnp.sum(e_t, axis=1, keepdims=True)
        p_t = e_t / s_t                                   # exact divide
        r = (jnp.sum(p_t * (z_t - z_s), axis=1, keepdims=True)
             + jnp.sum(p_t, axis=1, keepdims=True)
             * (jnp.log(s_s) - jnp.log(s_t)))
        dist_partial = jnp.sum(row_valid * r)
    elif dist_type == "hard":
        # F.cross_entropy(kd, teacher.argmax(dim=1))  (first index on ties)
        m_t = jnp.max(te, axis=1, keepdims=True)
        idx = jnp.min(jnp.where(te == m_t, iota_c, c_pad), axis=1, keepdims=True)
        m_k = jnp.max(kd, axis=1, keepdims=True)
        z_k = kd - m_k
        s_k = jnp.sum(jnp.exp(z_k), axis=1, keepdims=True)
        z_idx = jnp.sum(jnp.where(iota_c == idx, z_k, 0.0), axis=1, keepdims=True)
        dist_partial = jnp.sum(row_valid * (jnp.log(s_k) - z_idx))
    elif dist_type == "soft3":
        # symmetric KL against the mean distribution; the reference applies
        # log_softmax to *probabilities* (double normalization) - reproduced.
        # Fused: sum pm * (2*log pm - log_softmax(ps) - log_softmax(pt)).
        p_s = _softmax(kd)
        p_t = _softmax(te)
        p_m = 0.5 * (p_s + p_t)
        if has_col_pad:
            # keep padded columns out of the second softmax's denominator
            p_s_in = jnp.where(col_valid, p_s, NEG)
            p_t_in = jnp.where(col_valid, p_t, NEG)
        else:
            p_s_in, p_t_in = p_s, p_t
        lsp = _log_softmax(p_s_in)
        lst = _log_softmax(p_t_in)
        log_pm = jnp.log(jnp.maximum(p_m, 1e-30))         # xlogy(0, 0) = 0 semantics
        summand = p_m * (2.0 * log_pm - lsp - lst)
        if has_col_pad:
            summand = jnp.where(col_valid, summand, 0.0)
        dist_partial = jnp.sum(row_valid * jnp.sum(summand, axis=1, keepdims=True))
    elif dist_type == "soft4":
        p_s = _softmax(kd)
        p_t = _softmax(te)
        h = jnp.maximum(1.0 - p_s * p_t, 0.0)
        summand = h * h
        if has_col_pad:
            summand = jnp.where(col_valid, summand, 0.0)
        dist_partial = jnp.sum(row_valid * jnp.sum(summand, axis=1, keepdims=True))
    else:
        raise ValueError(f"unsupported distillation type {dist_type!r}")

    acc_ref[0] = acc_ref[0] + base_partial
    acc_ref[1] = acc_ref[1] + dist_partial

    @pl.when(step == pl.num_programs(1) - 1)
    def _():
        o_ref[0, 0, 0] = acc_ref[0]
        o_ref[0, 0, 1] = acc_ref[1]


# 'none' fast path: only (outputs, labels) are streamed.
def _base_ce_kernel(out_ref, lbl_ref, o_ref, acc_ref):
    step = pl.program_id(1)

    @pl.when(step == 0)
    def _():
        acc_ref[0] = jnp.float32(0.0)

    out = out_ref[...].astype(jnp.float32)
    lbl = lbl_ref[...]
    row_valid = (lbl >= 0).astype(jnp.float32)
    iota_c = lax.broadcasted_iota(jnp.int32, out.shape, 1)
    m = jnp.max(out, axis=1, keepdims=True)
    z = out - m
    s = jnp.sum(jnp.exp(z), axis=1, keepdims=True)
    z_lbl = jnp.sum(jnp.where(iota_c == lbl, z, 0.0), axis=1, keepdims=True)
    acc_ref[0] = acc_ref[0] + jnp.sum(row_valid * (jnp.log(s) - z_lbl))

    @pl.when(step == pl.num_programs(1) - 1)
    def _():
        o_ref[0, 0, 0] = acc_ref[0]


# ---------------------------------------------------------------------------
# wrapper-side helpers
# ---------------------------------------------------------------------------
def _round_up(x, m):
    return ((x + m - 1) // m) * m


def _pad2(x, rows, cols, row_fill, col_fill):
    r, c = x.shape
    if c != cols:
        x = jnp.pad(x, ((0, 0), (0, cols - c)), constant_values=col_fill)
    if r != rows:
        x = jnp.pad(x, ((0, rows - r), (0, 0)), constant_values=row_fill)
    return x


@functools.lru_cache(maxsize=None)
def _tpu_budget():
    """(vmem_limit_bytes, max_batch_tile) derived from the local TPU generation."""
    try:
        cap = int(pltpu.get_tpu_info().vmem_capacity_bytes)
    except Exception:
        cap = 64 * 1024 * 1024                       # conservative fallback (v7x-sized)
    if cap >= 100 * 1024 * 1024:                     # v5e / v6e: 128 MiB VMEM
        return min(int(cap * 0.75), 96 * 1024 * 1024), 512
    return min(int(cap * 0.75), 48 * 1024 * 1024), 256


def _pick_tile(batch, c_pad, d_pad, resident_bytes, vmem_limit, max_tb, c_streams):
    """Largest multiple-of-8 batch tile per split that fits the VMEM budget."""
    tb = min(max_tb, _round_up(max(1, (batch + NUM_SPLITS - 1) // NUM_SPLITS), 8))
    while tb > 8:
        stream = 2 * (c_streams * tb * c_pad * 4 + tb * d_pad * 2 + tb * 4)  # dbl-buffered
        temps = 10 * tb * c_pad * 4                     # in-kernel f32 temporaries (soft3 worst case)
        if stream + temps + resident_bytes <= int(vmem_limit * 0.8):
            break
        tb = max(8, _round_up(tb // 2, 8))
    return tb


def _resident_spec(block_shape, index_map, nbytes):
    """Constant-index resident block; single-buffered when big enough to matter."""
    if nbytes >= _RESIDENT_SINGLE_BUFFER_BYTES:
        try:
            return pl.BlockSpec(block_shape, index_map,
                                pipeline_mode=pl.Buffered(buffer_count=1))
        except Exception:
            pass   # older JAX without pipeline_mode: fall back to default buffering
    return pl.BlockSpec(block_shape, index_map)


def _compiler_params(vmem_limit):
    return pltpu.CompilerParams(
        dimension_semantics=("parallel", "arbitrary"),
        vmem_limit_bytes=vmem_limit)


# ---------------------------------------------------------------------------
# pallas_call wrappers
# ---------------------------------------------------------------------------
def base_cross_entropy_call(outputs, labels):
    B, C = outputs.shape
    c_pad = _round_up(C, 128)
    vmem_limit, max_tb = _tpu_budget()
    tb = _pick_tile(B, c_pad, 0, 0, vmem_limit, max_tb, c_streams=1)
    b_pad = _round_up(B, NUM_SPLITS * tb)
    steps = b_pad // (NUM_SPLITS * tb)

    out_p = _pad2(outputs.astype(jnp.float32), b_pad, c_pad, 0.0, NEG)
    lbl_p = jnp.pad(labels.astype(jnp.int32), (0, b_pad - B),
                    constant_values=-1).reshape(b_pad, 1)

    row_map = lambda s, i, steps=steps: (s * steps + i, 0)

    partials = pl.pallas_call(
        _base_ce_kernel,
        out_shape=jax.ShapeDtypeStruct((NUM_SPLITS, 1, 1), jnp.float32),
        grid_spec=pltpu.PrefetchScalarGridSpec(
            num_scalar_prefetch=0,
            grid=(NUM_SPLITS, steps),
            in_specs=[
                pl.BlockSpec((tb, c_pad), row_map),    # outputs
                pl.BlockSpec((tb, 1), row_map),        # labels (int32)
            ],
            out_specs=pl.BlockSpec((1, 1, 1), lambda s, i: (s, 0, 0),
                                   memory_space=pltpu.MemorySpace.SMEM),
            scratch_shapes=[pltpu.SMEM((1,), jnp.float32)],
        ),
        compiler_params=_compiler_params(vmem_limit),
    )(out_p, lbl_p)

    return jnp.sum(partials) / B


def distillation_loss_call(inputs, teacher_w, teacher_b, outputs, outputs_kd,
                           labels, dist_type, alpha, tau):
    B, C = outputs.shape
    D = inputs.shape[1]
    c_pad = _round_up(C, 128)
    d_pad = _round_up(D, 128)

    vmem_limit, max_tb = _tpu_budget()
    resident_bytes = d_pad * c_pad * 2 + c_pad * 4        # bf16 W + f32 bias
    tb = _pick_tile(B, c_pad, d_pad, resident_bytes, vmem_limit, max_tb, c_streams=2)
    b_pad = _round_up(B, NUM_SPLITS * tb)
    steps = b_pad // (NUM_SPLITS * tb)

    # lane-dense padding: class columns to a multiple of 128, batch rows to the
    # tile grid; padded rows carry label -1 and are masked out in-kernel.
    x_p = _pad2(inputs.astype(jnp.bfloat16), b_pad, d_pad, 0.0, 0.0)
    out_p = _pad2(outputs.astype(jnp.float32), b_pad, c_pad, 0.0, NEG)
    kd_p = _pad2(outputs_kd.astype(jnp.float32), b_pad, c_pad, 0.0, NEG)
    w_p = _pad2(jnp.asarray(teacher_w, jnp.bfloat16), d_pad, c_pad, 0.0, 0.0)
    b_p = _pad2(jnp.asarray(teacher_b, jnp.float32).reshape(1, -1), 1, c_pad, 0.0, NEG)
    lbl_p = jnp.pad(labels.astype(jnp.int32), (0, b_pad - B),
                    constant_values=-1).reshape(b_pad, 1)

    row_map = lambda s, i, steps=steps: (s * steps + i, 0)
    const_map = lambda s, i: (0, 0)

    kern = functools.partial(_distill_kernel, dist_type=dist_type,
                             tau=float(tau), n_classes=C, c_pad=c_pad)

    partials = pl.pallas_call(
        kern,
        out_shape=jax.ShapeDtypeStruct((NUM_SPLITS, 1, 2), jnp.float32),
        grid_spec=pltpu.PrefetchScalarGridSpec(
            num_scalar_prefetch=0,
            grid=(NUM_SPLITS, steps),
            in_specs=[
                pl.BlockSpec((tb, d_pad), row_map),                             # teacher inputs (bf16)
                _resident_spec((d_pad, c_pad), const_map, d_pad * c_pad * 2),   # teacher W (bf16, resident)
                _resident_spec((1, c_pad), const_map, c_pad * 4),               # teacher b (f32, resident)
                pl.BlockSpec((tb, c_pad), row_map),                             # outputs
                pl.BlockSpec((tb, c_pad), row_map),                             # outputs_kd
                pl.BlockSpec((tb, 1), row_map),                                 # labels (int32)
            ],
            out_specs=pl.BlockSpec((1, 1, 2), lambda s, i: (s, 0, 0),
                                   memory_space=pltpu.MemorySpace.SMEM),
            scratch_shapes=[pltpu.SMEM((2,), jnp.float32)],
        ),
        compiler_params=_compiler_params(vmem_limit),
    )(x_p, w_p, b_p, out_p, kd_p, lbl_p)

    base_sum = jnp.sum(partials[:, 0, 0])
    dist_sum = jnp.sum(partials[:, 0, 1])
    base_loss = base_sum / B
    if dist_type == "soft":
        dist_loss = dist_sum * (tau * tau) / (B * C)
    elif dist_type == "hard":
        dist_loss = dist_sum / B
    elif dist_type == "soft3":
        dist_loss = 0.5 * dist_sum / B
    else:  # soft4
        dist_loss = dist_sum / (B * C)
    return base_loss * (1.0 - alpha) + dist_loss * alpha


# ---------------------------------------------------------------------------
# Module-equivalent wrapper
# ---------------------------------------------------------------------------
class DistillationLoss:
    """JAX/Pallas port of DistillationLoss with a Linear(D->C) teacher."""

    def __init__(self, teacher_w, teacher_b, distillation_type, alpha, tau):
        assert distillation_type in ["none", "soft", "hard", "soft2", "soft3", "soft4"]
        if distillation_type == "soft2":
            # TODO(synk): scipy.stats.wasserstein_distance (host numpy) has no
            # Pallas equivalent; not implemented.
            raise NotImplementedError("soft2 (Wasserstein) is not translated")
        self.teacher_w = jnp.asarray(teacher_w)
        self.teacher_b = jnp.asarray(teacher_b).reshape(1, -1)
        self.distillation_type = distillation_type
        self.alpha = float(alpha)
        self.tau = float(tau)

    def __call__(self, inputs, outputs, labels):
        outputs_kd = None
        if isinstance(outputs, (tuple, list)):
            outputs, outputs_kd = outputs

        if self.distillation_type == "none":
            # Only the base cross-entropy path runs; no kd/teacher streams.
            return base_cross_entropy_call(outputs, labels)

        if outputs_kd is None:
            raise ValueError(
                "When knowledge distillation is enabled, the model is expected "
                "to return a Tuple[Tensor, Tensor]")

        # teacher forward is fused into the loss kernel (no grad by construction)
        x = jax.lax.stop_gradient(inputs)
        return distillation_loss_call(
            x, self.teacher_w, self.teacher_b, outputs, outputs_kd, labels,
            self.distillation_type, self.alpha, self.tau)


# ---------------------------------------------------------------------------
if __name__ == "__main__":
    # Deliberately non-aligned shapes: exercises C->128 column padding,
    # D->128 feature padding and batch-row padding/masking.
    B, D, C = 8, 96, 120

    key = jax.random.PRNGKey(0)
    k_in, k_out, k_kd, k_lab, k_w, k_b = jax.random.split(key, 6)

    inputs = jax.random.normal(k_in, (B, D), dtype=jnp.float32)
    outputs = jax.random.normal(k_out, (B, C), dtype=jnp.float32)
    outputs_kd = jax.random.normal(k_kd, (B, C), dtype=jnp.float32)
    labels = jax.random.randint(k_lab, (B,), 0, C, dtype=jnp.int32)

    # deterministic synthetic teacher Linear(D -> C)
    teacher_w = jax.random.normal(k_w, (D, C), dtype=jnp.float32) / jnp.sqrt(D)
    teacher_b = jax.random.normal(k_b, (C,), dtype=jnp.float32) * 0.01

    results = []
    for dist_type in ["none", "soft", "hard", "soft3", "soft4"]:
        crit = DistillationLoss(teacher_w, teacher_b, dist_type,
                                alpha=0.5, tau=2.0)
        loss = crit(inputs, (outputs, outputs_kd), labels)
        results.append(loss)

    for r in results:
        jax.block_until_ready(r)

    print("KERNEL_OK")
</pallas_src>

<mosaic_0001>
module attributes {stable_mosaic.version = 11 : i64} {
  func.func @_base_ce_kernel(%arg0: i32, %arg1: i32, %arg2: memref<8x128xf32, #tpu.memory_space<vmem>>, %arg3: memref<8x1xi32, #tpu.memory_space<vmem>>, %arg4: memref<1x1x1xf32, #tpu.memory_space<smem>>, %arg5: memref<1xf32, #tpu.memory_space<smem>>) attributes {dimension_semantics = [#tpu.dimension_semantics<parallel>, #tpu.dimension_semantics<arbitrary>], iteration_bounds = array<i64: 2, 1>, scalar_prefetch = 0 : i64, scratch_operands = 1 : i64, tpu.core_type = #tpu.core_type<tc>, window_params = [{transform_indices = @transform_0, window_bounds = array<i64: 8, 128>}, {transform_indices = @transform_1, window_bounds = array<i64: 8, 1>}, {transform_indices = @transform_2, window_bounds = array<i64: 1, 1, 1>}]} {
    %c0_i32 = arith.constant 0 : i32
    %0 = arith.cmpi eq, %arg1, %c0_i32 : i32
    %1 = arith.extui %0 : i1 to i32
    %c0_i32_0 = arith.constant 0 : i32
    %2 = arith.cmpi ne, %1, %c0_i32_0 : i32
    scf.if %2 {
      %cst_13 = arith.constant 0.000000e+00 : f32
      %c0_14 = arith.constant 0 : index
      %36 = memref.load %arg5[%c0_14] : memref<1xf32, #tpu.memory_space<smem>>
      memref.store %cst_13, %arg5[%c0_14] : memref<1xf32, #tpu.memory_space<smem>>
    } else {
    }
    %c0 = arith.constant 0 : index
    %c0_1 = arith.constant 0 : index
    %3 = vector.load %arg2[%c0, %c0_1] : memref<8x128xf32, #tpu.memory_space<vmem>>, vector<8x128xf32>
    %c0_2 = arith.constant 0 : index
    %c0_3 = arith.constant 0 : index
    %4 = vector.load %arg3[%c0_2, %c0_3] : memref<8x1xi32, #tpu.memory_space<vmem>>, vector<8x1xi32>
    %c0_i32_4 = arith.constant 0 : i32
    %5 = vector.broadcast %c0_i32_4 : i32 to vector<8x1xi32>
    %6 = arith.cmpi sge, %4, %5 : vector<8x1xi32>
    %7 = arith.extui %6 : vector<8x1xi1> to vector<8x1xi32>
    %8 = arith.sitofp %7 : vector<8x1xi32> to vector<8x1xf32>
    %9 = tpu.iota {dimensions = array<i32: 1>} : vector<8x128xi32>
    %cst = arith.constant dense<0xFF800000> : vector<8xf32>
    %10 = vector.multi_reduction <maximumf>, %3, %cst [1] : vector<8x128xf32> to vector<8xf32>
    %11 = vector.shape_cast %10 : vector<8xf32> to vector<8x1xf32>
    %12 = vector.broadcast %11 : vector<8x1xf32> to vector<8x128xf32>
    %13 = arith.subf %3, %12 : vector<8x128xf32>
    %14 = math.exp %13 : vector<8x128xf32>
    %cst_5 = arith.constant dense<0.000000e+00> : vector<8xf32>
    %15 = vector.multi_reduction <add>, %14, %cst_5 [1] : vector<8x128xf32> to vector<8xf32>
    %16 = vector.shape_cast %15 : vector<8xf32> to vector<8x1xf32>
    %17 = vector.broadcast %4 : vector<8x1xi32> to vector<8x128xi32>
    %18 = arith.cmpi eq, %9, %17 : vector<8x128xi32>
    %cst_6 = arith.constant 0.000000e+00 : f32
    %19 = vector.broadcast %cst_6 : f32 to vector<8x128xf32>
    %20 = arith.select %18, %13, %19 : vector<8x128xi1>, vector<8x128xf32>
    %cst_7 = arith.constant dense<0.000000e+00> : vector<8xf32>
    %21 = vector.multi_reduction <add>, %20, %cst_7 [1] : vector<8x128xf32> to vector<8xf32>
    %22 = vector.shape_cast %21 : vector<8xf32> to vector<8x1xf32>
    %c0_8 = arith.constant 0 : index
    %23 = memref.load %arg5[%c0_8] : memref<1xf32, #tpu.memory_space<smem>>
    %24 = math.log %16 : vector<8x1xf32>
    %25 = arith.subf %24, %22 : vector<8x1xf32>
    %26 = arith.mulf %8, %25 : vector<8x1xf32>
    %27 = vector.shape_cast %26 : vector<8x1xf32> to vector<1x8x1xf32>
    %cst_9 = arith.constant dense<0.000000e+00> : vector<1xf32>
    %28 = vector.multi_reduction <add>, %27, %cst_9 [1, 2] : vector<1x8x1xf32> to vector<1xf32>
    %29 = vector.shape_cast %28 : vector<1xf32> to vector<1x1x1xf32>
    %30 = vector.extract %29[0, 0, 0] : f32 from vector<1x1x1xf32>
    %31 = arith.addf %23, %30 : f32
    %c0_10 = arith.constant 0 : index
    %32 = memref.load %arg5[%c0_10] : memref<1xf32, #tpu.memory_space<smem>>
    memref.store %31, %arg5[%c0_10] : memref<1xf32, #tpu.memory_space<smem>>
    %c0_i32_11 = arith.constant 0 : i32
    %33 = arith.cmpi eq, %arg1, %c0_i32_11 : i32
    %34 = arith.extui %33 : i1 to i32
    %c0_i32_12 = arith.constant 0 : i32
    %35 = arith.cmpi ne, %34, %c0_i32_12 : i32
    scf.if %35 {
      %c0_13 = arith.constant 0 : index
      %36 = memref.load %arg5[%c0_13] : memref<1xf32, #tpu.memory_space<smem>>
      %c0_14 = arith.constant 0 : index
      %c0_15 = arith.constant 0 : index
      %c0_16 = arith.constant 0 : index
      %37 = memref.load %arg4[%c0_14, %c0_15, %c0_16] : memref<1x1x1xf32, #tpu.memory_space<smem>>
      memref.store %36, %arg4[%c0_14, %c0_15, %c0_16] : memref<1x1x1xf32, #tpu.memory_space<smem>>
    } else {
    }
    return
  }
  func.func @transform_0(%arg0: i32, %arg1: i32) -> (i32, i32) {
    %c1_i32 = arith.constant 1 : i32
    %0 = arith.muli %arg0, %c1_i32 : i32
    %1 = arith.addi %0, %arg1 : i32
    %c0_i32 = arith.constant 0 : i32
    %c0_i32_0 = arith.constant 0 : i32
    return %1, %c0_i32 : i32, i32
  }
  func.func @transform_1(%arg0: i32, %arg1: i32) -> (i32, i32) {
    %c1_i32 = arith.constant 1 : i32
    %0 = arith.muli %arg0, %c1_i32 : i32
    %1 = arith.addi %0, %arg1 : i32
    %c0_i32 = arith.constant 0 : i32
    %c0_i32_0 = arith.constant 0 : i32
    return %1, %c0_i32 : i32, i32
  }
  func.func @transform_2(%arg0: i32, %arg1: i32) -> (i32, i32, i32) {
    %c0_i32 = arith.constant 0 : i32
    %c0_i32_0 = arith.constant 0 : i32
    %c0_i32_1 = arith.constant 0 : i32
    return %arg0, %c0_i32, %c0_i32_0 : i32, i32, i32
  }
}

</mosaic_0001>

<llo_original>
// kernel: tpu_custom_call.1
$region0: #{tpu_custom_call.1}
  #allocation0 [shape = 'u32[]', space=smem, size = 0x4, offset = 0x4, fixed_abs, tag = 'smem constant byte address 0x4 - core index']
  #allocation1 [shape = 'u32[144,128]{1,0:T(1,128)}', space=vmem, size = 0x12000, scoped, tag = 'internal scratch']
  #allocation2 [shape = 'f32[1]{0:T(128)}', space=smem, size = 0x200, scoped, tag = 'scratch operand']
  %s0 = inlined_call_operand.vmem [shape: f32[16,128], index: 0, kind: input, shape index: {}]
  %s1 = inlined_call_operand.vmem [shape: s32[16,1], index: 1, kind: input, shape index: {}]
  %s2 = inlined_call_operand.vmem [shape: f32[2,1,1], index: 2, kind: output, shape index: {}]
  %s3 = sld [smem:[#allocation0]]
  $region49: #{tpu_custom_call.1} parent=0
    _
  %s5 = ssub.s32 1, %s3
  %s6 = scalar_select 0, %s5, %s3
  $region1: #{tpu_custom_call.1} parent=0
    #allocation3 [shape = 'u8[1024]{0}', space=smem, size = 0x400, scoped, tag = 'output window, operand 0']
    #allocation4 [shape = 's32[2]{0}', space=sflag, size = 0x8, scoped, tag = 'scoped memory for tpu_custom_call.1']
    %7 = vsyncpa [#allocation4], 0
    %s8 = scalar_lea.sflag [#allocation4], 1
    %9 = vsyncpa %s8, 0
    loop: start=0, step=1, limit=4
    $region2: #{tpu_custom_call.1} parent=1 // loop_pre_header
      _
    $region3: #{tpu_custom_call.1} parent=1 // loop_header
      %s11 = sphi 0, %s15
      %p12 = scmp.ge.s32.totalorder %s11, 4
      %s18 = sphi 0, %s30
      %s19 = sphi 0, %s26
      %s20 = sphi 0, %s18
      %s21 = sphi 0, %s19
      %s22 = sphi 0, %s20
      %s23 = sphi 0, %s21
      %s35 = sphi 0, %s37
      %s38 = sphi 0, %s35
      %s39 = sphi 0, %s38
      %s55 = sphi 0, %s39
      %s63 = sphi 0, %s65
      %s66 = sphi 0, %s63
      %s67 = sphi 0, %s66
      %s83 = sphi 0, %s67
      %s89 = sphi 0, %s91
      %s92 = sphi 0, %s89
      %s93 = sphi 0, %s92
      %s109 = sphi 0, %s93
    $region4: #{tpu_custom_call.1} parent=1 // loop_header_branch
      %14 = sbr.rel (%p12) target = $region8
    $region5: #{tpu_custom_call.1} parent=1 // loop_body
      %s16 = ssub.s32 %s11, 1
      %s17 = ssub.s32 %s11, 2
      %s24 = sadd.s32 1, %s19
      %p25 = scmp.ge.s32.totalorder %s24, 1
      %s26 = scalar_select %p25, 0, %s24
      %s27 = sadd.s32 1, %s18
      %s28 = scalar_select %p25, %s27, %s18
      %p29 = scmp.ge.s32.totalorder %s28, 2
      %s30 = scalar_select %p29, 0, %s28
      %s31 = sadd.s32 %s18, %s19
      %s32 = sadd.s32 %s30, %s26
      %s33 = ssub.s32 %s31, %s32
      %p34 = scmp.eq.s32.totalorder %s33, 0
      %s36 = sadd.s32 %s35, 1
      %s37 = scalar_select %p34, %s35, %s36
      %p40 = pneg %p34
      %p41 = scmp.eq.s32.totalorder %s11, 1
      %p42 = por %p40, %p41
      %p43 = scmp.ne.s32.totalorder %s35, %s38
      %p44 = scmp.eq.s32.totalorder %s11, 0
      %p45 = por %p43, %p44
      %p46 = scmp.ne.s32.totalorder %s35, %s38
      %p47 = scmp.eq.s32.totalorder %s16, 1
      %p48 = por %p46, %p47
      %p49 = scmp.ne.s32.totalorder %s38, %s39
      %p50 = scmp.eq.s32.totalorder %s16, 0
      %p51 = por %p49, %p50
      %p52 = scmp.ne.s32.totalorder %s38, %s39
      %p53 = scmp.eq.s32.totalorder %s17, 1
      %p54 = por %p52, %p53
      %p56 = scmp.ne.s32.totalorder %s39, %s55
      %p57 = scmp.eq.s32.totalorder %s17, 0
      %p58 = por %p56, %p57
      %s59 = sadd.s32 %s18, %s19
      %s60 = sadd.s32 %s30, %s26
      %s61 = ssub.s32 %s59, %s60
      %p62 = scmp.eq.s32.totalorder %s61, 0
      %s64 = sadd.s32 %s63, 1
      %s65 = scalar_select %p62, %s63, %s64
      %p68 = pneg %p62
      %p69 = scmp.eq.s32.totalorder %s11, 1
      %p70 = por %p68, %p69
      %p71 = scmp.ne.s32.totalorder %s63, %s66
      %p72 = scmp.eq.s32.totalorder %s11, 0
      %p73 = por %p71, %p72
      %p74 = scmp.ne.s32.totalorder %s63, %s66
      %p75 = scmp.eq.s32.totalorder %s16, 1
      %p76 = por %p74, %p75
      %p77 = scmp.ne.s32.totalorder %s66, %s67
      %p78 = scmp.eq.s32.totalorder %s16, 0
      %p79 = por %p77, %p78
      %p80 = scmp.ne.s32.totalorder %s66, %s67
      %p81 = scmp.eq.s32.totalorder %s17, 1
      %p82 = por %p80, %p81
      %p84 = scmp.ne.s32.totalorder %s67, %s83
      %p85 = scmp.eq.s32.totalorder %s17, 0
      %p86 = por %p84, %p85
      %s87 = ssub.s32 %s18, %s30
      %p88 = scmp.eq.s32.totalorder %s87, 0
      %s90 = sadd.s32 %s89, 1
      %s91 = scalar_select %p88, %s89, %s90
      %p94 = pneg %p88
      %p95 = scmp.eq.s32.totalorder %s11, 1
      %p96 = por %p94, %p95
      %p97 = scmp.ne.s32.totalorder %s89, %s92
      %p98 = scmp.eq.s32.totalorder %s11, 0
      %p99 = por %p97, %p98
      %p100 = scmp.ne.s32.totalorder %s89, %s92
      %p101 = scmp.eq.s32.totalorder %s16, 1
      %p102 = por %p100, %p101
      %p103 = scmp.ne.s32.totalorder %s92, %s93
      %p104 = scmp.eq.s32.totalorder %s16, 0
      %p105 = por %p103, %p104
      %p106 = scmp.ne.s32.totalorder %s92, %s93
      %p107 = scmp.eq.s32.totalorder %s17, 1
      %p108 = por %p106, %p107
      %p110 = scmp.ne.s32.totalorder %s93, %s109
      %p111 = scmp.eq.s32.totalorder %s17, 0
      %p112 = por %p110, %p111
      %p113 = scmp.le.s32.totalorder 1, %s11
      %p114 = scmp.lt.s32.totalorder %s11, 3
      %p115 = pnand %p113, %p114
      %p116 = pneg %p115
      // Predicated region
      $region9: #{tpu_custom_call.1} parent=5 // pred_check
        _
      $region10: #{tpu_custom_call.1} parent=5 // pred_check_branch
        %118 = sbr.rel (%p115) target = $region12
      $region11: #{tpu_custom_call.1} parent=5 // pred_region
        %s119 = ssub.s32 %s11, 1
      $region12: #{tpu_custom_call.1} parent=5 // pred_fallthru
        _
      %p120 = scmp.lt.s32.totalorder %s11, 2
      // Predicated region
      $region13: #{tpu_custom_call.1} parent=5 // pred_check
        %p121 = pneg %p120
      $region14: #{tpu_custom_call.1} parent=5 // pred_check_branch
        %123 = sbr.rel (%p121) target = $region16
      $region15: #{tpu_custom_call.1} parent=5 // pred_region
        // Predicated region
        $region17: #{tpu_custom_call.1} parent=15 // pred_check
          %p124 = pneg %p45
        $region18: #{tpu_custom_call.1} parent=15 // pred_check_branch
          %126 = sbr.rel (%p124) target = $region20
        $region19: #{tpu_custom_call.1} parent=15 // pred_region
          %s127 = sadd.s32 %s18, %s19
          %p128 = scmp.lt.s32.totalorder %s127, 1
          %s129 = scalar_select %p128, %s127, 1
          %s130 = smul.addr %s129, 8
          %s131 = scalar_lea.vmem %s0, %s130
          %s132 = sadd.s32 %s18, %s19
        $region20: #{tpu_custom_call.1} parent=15 // pred_fallthru
          _
        // Predicated region
        $region21: #{tpu_custom_call.1} parent=15 // pred_check
          %p133 = pneg %p73
        $region22: #{tpu_custom_call.1} parent=15 // pred_check_branch
          %135 = sbr.rel (%p133) target = $region24
        $region23: #{tpu_custom_call.1} parent=15 // pred_region
          %s136 = sadd.s32 %s18, %s19
          %p137 = scmp.lt.s32.totalorder %s136, 1
          %s138 = scalar_select %p137, %s136, 1
          %s139 = smul.addr %s138, 8
          %s140 = scalar_lea.vmem %s1, %s139
          %s141 = sadd.s32 %s18, %s19
        $region24: #{tpu_custom_call.1} parent=15 // pred_fallthru
          _
      $region16: #{tpu_custom_call.1} parent=5 // pred_fallthru
        _
      %p142 = scmp.le.s32.totalorder 1, %s11
      %p143 = scmp.lt.s32.totalorder %s11, 3
      %p144 = pnand %p142, %p143
      %p145 = pneg %p144
      // Predicated region
      $region25: #{tpu_custom_call.1} parent=5 // pred_check
        _
      $region26: #{tpu_custom_call.1} parent=5 // pred_check_branch
        %147 = sbr.rel (%p144) target = $region28
      $region27: #{tpu_custom_call.1} parent=5 // pred_region
        %s148 = ssub.s32 %s11, 1
        %s149 = sadd.s32 %s20, %s21
        %p150 = scmp.lt.s32.totalorder %s149, 1
        %s151 = scalar_select %p150, %s149, 1
        %s152 = smul.addr %s151, 8
        %s153 = scalar_lea.vmem %s0, %s152
        %p154 = pneg %p51
        %p155 = pneg %p48
        %s156 = sadd.s32 %s20, %s21
        %p157 = scmp.lt.s32.totalorder %s156, 1
        %s158 = scalar_select %p157, %s156, 1
        %s159 = smul.addr %s158, 8
        %s160 = scalar_lea.vmem %s1, %s159
        %p161 = pneg %p79
        %p162 = pneg %p76
        %p163 = pneg %p105
        %p164 = pneg %p102
        %s165 = sand.u32 %s92, 1
        %s166 = scalar_lea.sflag [#allocation4], %s165
        %s167 = sand.u32 %s92, 1
        %s168 = smul.addr %s167, 128
        %s169 = scalar_lea.smem [#allocation3], %s168
        %s170 = sadd.s32 %s20, %s21
        %p171 = scmp.lt.s32.totalorder %s170, 1
        %s172 = scalar_select %p171, %s170, 1
        %s173 = smul.addr %s172, 8
        %s174 = scalar_lea.vmem %s0, %s173
        %s175 = sadd.s32 %s20, %s21
        %s176 = sadd.s32 %s20, %s21
        %p177 = scmp.lt.s32.totalorder %s176, 1
        %s178 = scalar_select %p177, %s176, 1
        %s179 = smul.addr %s178, 8
        %s180 = scalar_lea.vmem %s1, %s179
        %s181 = sadd.s32 %s20, %s21
        %p182 = scmp.eq.s32.totalorder %s21, 0
        // Predicated region
        $region29: #{tpu_custom_call.1} parent=27 // pred_check
          %p183 = pneg %p182
        $region30: #{tpu_custom_call.1} parent=27 // pred_check_branch
          %185 = sbr.rel (%p183) target = $region32
        $region31: #{tpu_custom_call.1} parent=27 // pred_region
          %s186 = scalar_lea.smem [#allocation2], 0
          %187 = sst [smem:[%s186]] 0.0
        $region32: #{tpu_custom_call.1} parent=27 // pred_fallthru
          _
        %v188 = vld [vmem:[%s174] sm:$0xff]
        %v189 = vld [vmem:[%s180] sm:$0xff]
        %vm190 = vcmp.ge.s32.totalorder %v189, 0
        %v191 = vsel %vm190, 1, 0
        %v192 = vcvt.s32.f32 %v191
        %v193 = vlaneseq
        %v194 = vand.u32 %v193, 127
        %195 = vmax.xlane.f32.xlu0 %v188
        %v196 = vpop.xlane.xlu0 %195
        %v197 = vsub.f32 %v188, %v196
        %v198 = vmul.f32 %v197, 1.442695
        %v199 = vpow.pop %v198
        %200 = vadd.xlane.f32.xlu0 %v199
        %v201 = vpop.xlane.xlu0 %200
        %202 = vset.pattern.permute.xlu0 0
        %203 = vperm.xlu0 %202, %v189
        %v204 = vpop.permute.xlu0 %203
        %vm205 = vcmp.eq.s32.totalorder %v194, %v204
        %v206 = vsel %vm205, %v197, 0.0
        %207 = vadd.xlane.f32.xlu0 %v206
        %v208 = vpop.xlane.xlu0 %207
        %s209 = sld [smem:[#allocation2]]
        %v210 = vlog2.pop %v201
        %v211 = vmul.f32 %v210, 0.6931472
        %v212 = vsub.f32 %v211, %v208
        %v213 = vmul.f32 %v192, %v212
        %vm214 = vcmask 7168
        %v215 = vsel %vm214, %v213, 0.0
        %216 = vadd.xlane.f32.xlu0 %v215
        %v217 = vpop.xlane.xlu0 %216
        %v218 = vrot.slane %v217, 4
        %v219 = vadd.f32 %v217, %v218
        %v220 = vrot.slane %v219, 2
        %v221 = vadd.f32 %v219, %v220
        %v222 = vrot.slane %v221, 1
        %v223 = vadd.f32 %v221, %v222
        %s224 = vtos %v223
        %s225 = sadd.f32 %s209, %s224
        %s226 = scalar_lea.smem [#allocation2], 0
        %227 = sst [smem:[%s226]] %s225
        // Predicated region
        $region33: #{tpu_custom_call.1} parent=27 // pred_check
          %p228 = pneg %p182
        $region34: #{tpu_custom_call.1} parent=27 // pred_check_branch
          %230 = sbr.rel (%p228) target = $region36
        $region35: #{tpu_custom_call.1} parent=27 // pred_region
          %s231 = sld [smem:[#allocation2]]
          %s232 = scalar_lea.smem %s169, 0 [#allocation3]
          %233 = sst [smem:[%s232]] %s231
        $region36: #{tpu_custom_call.1} parent=27 // pred_fallthru
          _
        %s234 = sand.u32 %s92, 1
        %s235 = scalar_lea.sflag [#allocation4], %s234
        %s236 = sand.u32 %s92, 1
        %s237 = smul.addr %s236, 128
        %s238 = scalar_lea.smem [#allocation3], %s237
        // Predicated region
        $region37: #{tpu_custom_call.1} parent=27 // pred_check
          %p239 = pneg %p102
        $region38: #{tpu_custom_call.1} parent=27 // pred_check_branch
          %241 = sbr.rel (%p239) target = $region40
        $region39: #{tpu_custom_call.1} parent=27 // pred_region
          %s243 = ssub.s32 16, 16
          %244 = vsyncadd %s235, %s243
          %s245 = scalar_lea.vmem %s2, %s20
          %s247 = sshll.u32 %s245, 4
          %s248 = int_to_ptr.vmem [resolvable:$true] %s247
          %250 = dma.smem_to_vmem %s238, 16, %s248, %s235
        $region40: #{tpu_custom_call.1} parent=27 // pred_fallthru
          _
      $region28: #{tpu_custom_call.1} parent=5 // pred_fallthru
        _
      %p251 = scmp.le.s32.totalorder 2, %s11
      // Predicated region
      $region41: #{tpu_custom_call.1} parent=5 // pred_check
        %p252 = pneg %p251
      $region42: #{tpu_custom_call.1} parent=5 // pred_check_branch
        %254 = sbr.rel (%p252) target = $region44
      $region43: #{tpu_custom_call.1} parent=5 // pred_region
        %s255 = ssub.s32 %s11, 2
        // Predicated region
        $region45: #{tpu_custom_call.1} parent=43 // pred_check
          %p256 = pneg %p108
        $region46: #{tpu_custom_call.1} parent=43 // pred_check_branch
          %258 = sbr.rel (%p256) target = $region48
        $region47: #{tpu_custom_call.1} parent=43 // pred_region
          %s259 = sand.u32 %s93, 1
          %s260 = scalar_lea.sflag [#allocation4], %s259
          %s261 = sand.u32 %s93, 1
          %s262 = smul.addr %s261, 128
          %s263 = scalar_lea.smem [#allocation3], %s262
          %264 = dma.done %s260, 16
        $region48: #{tpu_custom_call.1} parent=43 // pred_fallthru
          _
        %265 = sfence
      $region44: #{tpu_custom_call.1} parent=5 // pred_fallthru
        _
    $region6: #{tpu_custom_call.1} parent=1 // loop_footer
      %s15 = sadd.s32 1, %s11
    $region7: #{tpu_custom_call.1} parent=1 // loop_footer_branch
      %10 = sbr.rel target = $region3
    $region8: #{tpu_custom_call.1} parent=1 // loop_exit
      _
    %266 = vsyncpa [#allocation4], 1
    %s267 = scalar_lea.sflag [#allocation4], 1
    %268 = vsyncpa %s267, 1

</llo_original>
